<compile_context>
chip_gen: v7x
topology: tpu7x:2x2x1
jax: 0.10.0
libtpu: 0.0.40
codegen_flags: <defaults>
</compile_context>

<pallas_src>
import functools

import jax
import jax.numpy as jnp
from jax import lax
from jax.experimental import pallas as pl
from jax.experimental.pallas import tpu as pltpu

_LANES = 128
_MAX_BLOCK_ROWS = 2048   # 2048 x 128 f32 = 1 MiB per input per pipeline buffer
_NUM_PARALLEL = 2        # megacore split on v7x; harmless on 1-TC chips


def _wbce_kernel(*refs, block_rows, steps_per_slice, total_rows, has_weight):
    if has_weight:
        yp_ref, yt_ref, w_ref, wbce_out, yt_out = refs
    else:
        yp_ref, yt_ref, wbce_out, yt_out = refs
        w_ref = None

    p = pl.program_id(0)   # parallel slice of the row range
    i = pl.program_id(1)   # reduction steps within the slice

    @pl.when(i == 0)
    def _():
        wbce_out[...] = jnp.zeros_like(wbce_out)
        yt_out[...] = jnp.zeros_like(yt_out)

    # Row mask for the (possibly partial / phantom) trailing block of this slice.
    # Rows >= total_rows are out-of-bounds garbage from the edge block (or a
    # clamped phantom block) and must contribute exactly 0 to both sums.
    base_row = (p * steps_per_slice + i) * block_rows
    row_iota = lax.broadcasted_iota(jnp.int32, (block_rows, _LANES), 0)
    mask = row_iota < (total_rows - base_row)

    yp = jnp.where(mask, yp_ref[...].astype(jnp.float32), 0.5)  # finite logs
    yt = jnp.where(mask, yt_ref[...].astype(jnp.float32), 0.0)

    # PyTorch F.binary_cross_entropy clamps the log terms at -100.
    log_p = jnp.maximum(jnp.log(yp), -100.0)
    log_1mp = jnp.maximum(jnp.log(1.0 - yp), -100.0)
    bce = -(yt * log_p + (1.0 - yt) * log_1mp)
    if has_weight:
        w = jnp.where(mask, w_ref[...].astype(jnp.float32), 0.0)
        bce = bce * w

    # vreg-shaped (1,8,128) accumulation: pure VPU adds every step, no per-step
    # cross-lane collapse through the XLU.
    wbce_out[...] += jnp.sum(
        bce.reshape(block_rows // 8, 8, _LANES), axis=0, keepdims=True)
    yt_out[...] += jnp.sum(
        yt.reshape(block_rows // 8, 8, _LANES), axis=0, keepdims=True)


def weighted_binary_crossentropy_pallas(y_pred, y_true, weight, k=4):
    """Returns the scalar loss, matching the PyTorch module's forward."""
    assert y_pred.shape == y_true.shape
    n = 1
    for d in y_pred.shape:
        n *= d

    weight = jnp.asarray(weight)
    has_weight = weight.size != 1  # scalar weight is applied in the epilogue

    tile_elems = 8 * _LANES
    pad = (-n) % tile_elems  # 0 in the common case -> no copies in the wrapper

    def to_rows(x):
        xf = jnp.ravel(x)
        if pad:
            # Rare ragged fallback; zero padding contributes exactly 0 to both
            # sums (yp=0 -> bce=0 with yt=0; yt=0; w=0).
            xf = jnp.pad(xf, (0, pad))
        return xf.reshape(-1, _LANES)

    inputs = [to_rows(y_pred), to_rows(y_true)]
    if has_weight:
        # TODO(synk): a per-channel weight could be applied in-kernel instead of
        # being materialized to full shape (saves 1/3 of HBM bytes).
        w_full = jnp.broadcast_to(weight, y_pred.shape).astype(y_pred.dtype)
        inputs.append(to_rows(w_full))

    rows = inputs[0].shape[0]                 # multiple of 8 by construction
    block_rows = min(_MAX_BLOCK_ROWS, rows)   # multiple of 8
    num_blocks = pl.cdiv(rows, block_rows)
    par = _NUM_PARALLEL if num_blocks >= _NUM_PARALLEL else 1
    steps = pl.cdiv(num_blocks, par)

    def in_map(p, i):
        # Clamp phantom blocks (p*steps+i >= num_blocks) to a valid block; the
        # in-kernel row mask zeroes their contribution.
        return (jnp.minimum(p * steps + i, num_blocks - 1), 0)

    in_spec = pl.BlockSpec((block_rows, _LANES), in_map)
    out_spec = pl.BlockSpec((1, 8, _LANES), lambda p, i: (p, 0, 0))

    kernel = functools.partial(
        _wbce_kernel,
        block_rows=block_rows,
        steps_per_slice=steps,
        total_rows=rows,
        has_weight=has_weight,
    )

    wbce_part, yt_part = pl.pallas_call(
        kernel,
        out_shape=(
            jax.ShapeDtypeStruct((par, 8, _LANES), jnp.float32),
            jax.ShapeDtypeStruct((par, 8, _LANES), jnp.float32),
        ),
        grid_spec=pltpu.PrefetchScalarGridSpec(
            num_scalar_prefetch=0,
            grid=(par, steps),
            in_specs=[in_spec] * len(inputs),
            out_specs=[out_spec, out_spec],
        ),
        compiler_params=pltpu.CompilerParams(
            dimension_semantics=("parallel", "arbitrary"),
        ),
    )(*inputs)

    # Tiny scalar epilogue (a few KB) done in the wrapper.
    kf = float(k)
    inv_n = 1.0 / float(n)
    bcy = jnp.sum(wbce_part) * inv_n            # mean(weight * bce)
    if not has_weight:
        bcy = bcy * weight.reshape(()).astype(jnp.float32)
    mean_yt = jnp.sum(yt_part) * inv_n          # mean(y_true)
    return bcy * (1.0 + mean_yt * (kf - 1.0)) * (kf + 1.0) / (2.0 * kf)


def _reference(y_pred, y_true, weight, k=4):
    """Pure-JAX reference mirroring the PyTorch forward."""
    yp = y_pred.astype(jnp.float32)
    yt = y_true.astype(jnp.float32)
    w = jnp.broadcast_to(jnp.asarray(weight, jnp.float32), yp.shape)
    log_p = jnp.maximum(jnp.log(yp), -100.0)
    log_1mp = jnp.maximum(jnp.log(1.0 - yp), -100.0)
    bce = -(yt * log_p + (1.0 - yt) * log_1mp)
    bcy = jnp.mean(bce * w)
    loss = bcy * (1.0 + yt * (k - 1.0)) * (k + 1.0) / (2.0 * k)
    return jnp.mean(loss)


if __name__ == "__main__":
    key = jax.random.PRNGKey(0)
    k_pred, k_true, k_w = jax.random.split(key, 3)

    # layout: NCHW, matching the PyTorch convention
    shape = (2, 4, 16, 16)
    y_pred = jax.random.uniform(
        k_pred, shape, jnp.float32, minval=1e-4, maxval=1.0 - 1e-4)
    y_true = jax.random.bernoulli(k_true, 0.3, shape).astype(jnp.float32)
    weight = jax.random.uniform(k_w, shape, jnp.float32, minval=0.5, maxval=2.0)

    # Full per-element weight path.
    out = weighted_binary_crossentropy_pallas(y_pred, y_true, weight, k=4)
    out = jax.block_until_ready(out)
    ref = _reference(y_pred, y_true, weight, k=4)
    assert jnp.allclose(out, ref, rtol=3e-4, atol=1e-6), (out, ref)

    # Scalar weight path (weight not streamed from HBM).
    w_scalar = jnp.asarray(1.7, jnp.float32)
    out_s = weighted_binary_crossentropy_pallas(y_pred, y_true, w_scalar, k=4)
    out_s = jax.block_until_ready(out_s)
    ref_s = _reference(y_pred, y_true, w_scalar, k=4)
    assert jnp.allclose(out_s, ref_s, rtol=3e-4, atol=1e-6), (out_s, ref_s)

    print("KERNEL_OK")
</pallas_src>

<mosaic_0001>
module attributes {stable_mosaic.version = 11 : i64} {
  func.func @_wbce_kernel(%arg0: i32, %arg1: i32, %arg2: memref<16x128xf32, #tpu.memory_space<vmem>>, %arg3: memref<16x128xf32, #tpu.memory_space<vmem>>, %arg4: memref<16x128xf32, #tpu.memory_space<vmem>>, %arg5: memref<1x8x128xf32, #tpu.memory_space<vmem>>, %arg6: memref<1x8x128xf32, #tpu.memory_space<vmem>>) attributes {dimension_semantics = [#tpu.dimension_semantics<parallel>, #tpu.dimension_semantics<arbitrary>], iteration_bounds = array<i64: 1, 1>, scalar_prefetch = 0 : i64, scratch_operands = 0 : i64, tpu.core_type = #tpu.core_type<tc>, window_params = [{transform_indices = @transform_0, window_bounds = array<i64: 16, 128>}, {transform_indices = @transform_1, window_bounds = array<i64: 16, 128>}, {transform_indices = @transform_2, window_bounds = array<i64: 16, 128>}, {transform_indices = @transform_3, window_bounds = array<i64: 1, 8, 128>}, {transform_indices = @transform_4, window_bounds = array<i64: 1, 8, 128>}]} {
    %c0_i32 = arith.constant 0 : i32
    %0 = arith.cmpi eq, %arg1, %c0_i32 : i32
    %1 = arith.extui %0 : i1 to i32
    %c0_i32_0 = arith.constant 0 : i32
    %2 = arith.cmpi ne, %1, %c0_i32_0 : i32
    scf.if %2 {
      %cst_28 = arith.constant 0.000000e+00 : f32
      %47 = vector.broadcast %cst_28 : f32 to vector<1x8x128xf32>
      %c0_29 = arith.constant 0 : index
      %c0_30 = arith.constant 0 : index
      %c0_31 = arith.constant 0 : index
      %48 = vector.load %arg5[%c0_29, %c0_30, %c0_31] : memref<1x8x128xf32, #tpu.memory_space<vmem>>, vector<1x8x128xf32>
      tpu.vector_store %arg5[%c0_29, %c0_30, %c0_31], %47 {strides = array<i32>} : memref<1x8x128xf32, #tpu.memory_space<vmem>>, vector<1x8x128xf32>,
      %cst_32 = arith.constant 0.000000e+00 : f32
      %49 = vector.broadcast %cst_32 : f32 to vector<1x8x128xf32>
      %c0_33 = arith.constant 0 : index
      %c0_34 = arith.constant 0 : index
      %c0_35 = arith.constant 0 : index
      %50 = vector.load %arg6[%c0_33, %c0_34, %c0_35] : memref<1x8x128xf32, #tpu.memory_space<vmem>>, vector<1x8x128xf32>
      tpu.vector_store %arg6[%c0_33, %c0_34, %c0_35], %49 {strides = array<i32>} : memref<1x8x128xf32, #tpu.memory_space<vmem>>, vector<1x8x128xf32>,
    } else {
    }
    %c1_i32 = arith.constant 1 : i32
    %3 = arith.muli %arg0, %c1_i32 : i32
    %4 = arith.addi %3, %arg1 : i32
    %c16_i32 = arith.constant 16 : i32
    %5 = arith.muli %4, %c16_i32 : i32
    %6 = tpu.iota {dimensions = array<i32: 0>} : vector<16x128xi32>
    %c16_i32_1 = arith.constant 16 : i32
    %7 = arith.subi %c16_i32_1, %5 : i32
    %8 = vector.broadcast %7 : i32 to vector<16x128xi32>
    %9 = arith.cmpi slt, %6, %8 : vector<16x128xi32>
    %c0 = arith.constant 0 : index
    %c0_2 = arith.constant 0 : index
    %10 = vector.load %arg2[%c0, %c0_2] : memref<16x128xf32, #tpu.memory_space<vmem>>, vector<16x128xf32>
    %cst = arith.constant 5.000000e-01 : f32
    %11 = vector.broadcast %cst : f32 to vector<16x128xf32>
    %12 = arith.select %9, %10, %11 : vector<16x128xi1>, vector<16x128xf32>
    %c0_3 = arith.constant 0 : index
    %c0_4 = arith.constant 0 : index
    %13 = vector.load %arg3[%c0_3, %c0_4] : memref<16x128xf32, #tpu.memory_space<vmem>>, vector<16x128xf32>
    %cst_5 = arith.constant 0.000000e+00 : f32
    %14 = vector.broadcast %cst_5 : f32 to vector<16x128xf32>
    %15 = arith.select %9, %13, %14 : vector<16x128xi1>, vector<16x128xf32>
    %16 = math.log %12 : vector<16x128xf32>
    %cst_6 = arith.constant -1.000000e+02 : f32
    %17 = vector.broadcast %cst_6 : f32 to vector<16x128xf32>
    %18 = arith.maximumf %16, %17 : vector<16x128xf32>
    %cst_7 = arith.constant 1.000000e+00 : f32
    %19 = vector.broadcast %cst_7 : f32 to vector<16x128xf32>
    %20 = arith.subf %19, %12 : vector<16x128xf32>
    %21 = math.log %20 : vector<16x128xf32>
    %cst_8 = arith.constant -1.000000e+02 : f32
    %22 = vector.broadcast %cst_8 : f32 to vector<16x128xf32>
    %23 = arith.maximumf %21, %22 : vector<16x128xf32>
    %24 = arith.mulf %15, %18 : vector<16x128xf32>
    %cst_9 = arith.constant 1.000000e+00 : f32
    %25 = vector.broadcast %cst_9 : f32 to vector<16x128xf32>
    %26 = arith.subf %25, %15 : vector<16x128xf32>
    %27 = arith.mulf %26, %23 : vector<16x128xf32>
    %28 = arith.addf %24, %27 : vector<16x128xf32>
    %cst_10 = arith.constant 0.000000e+00 : f32
    %29 = vector.broadcast %cst_10 : f32 to vector<16x128xf32>
    %30 = arith.subf %29, %28 : vector<16x128xf32>
    %c0_11 = arith.constant 0 : index
    %c0_12 = arith.constant 0 : index
    %31 = vector.load %arg4[%c0_11, %c0_12] : memref<16x128xf32, #tpu.memory_space<vmem>>, vector<16x128xf32>
    %cst_13 = arith.constant 0.000000e+00 : f32
    %32 = vector.broadcast %cst_13 : f32 to vector<16x128xf32>
    %33 = arith.select %9, %31, %32 : vector<16x128xi1>, vector<16x128xf32>
    %34 = arith.mulf %30, %33 : vector<16x128xf32>
    %c0_14 = arith.constant 0 : index
    %c0_15 = arith.constant 0 : index
    %c0_16 = arith.constant 0 : index
    %35 = vector.load %arg5[%c0_14, %c0_15, %c0_16] : memref<1x8x128xf32, #tpu.memory_space<vmem>>, vector<1x8x128xf32>
    %36 = vector.shape_cast %34 : vector<16x128xf32> to vector<2x8x128xf32>
    %cst_17 = arith.constant dense<0.000000e+00> : vector<8x128xf32>
    %37 = vector.multi_reduction <add>, %36, %cst_17 [0] : vector<2x8x128xf32> to vector<8x128xf32>
    %38 = vector.shape_cast %37 : vector<8x128xf32> to vector<1x8x128xf32>
    %39 = arith.addf %35, %38 : vector<1x8x128xf32>
    %c0_18 = arith.constant 0 : index
    %c0_19 = arith.constant 0 : index
    %c0_20 = arith.constant 0 : index
    %40 = vector.load %arg5[%c0_18, %c0_19, %c0_20] : memref<1x8x128xf32, #tpu.memory_space<vmem>>, vector<1x8x128xf32>
    tpu.vector_store %arg5[%c0_18, %c0_19, %c0_20], %39 {strides = array<i32>} : memref<1x8x128xf32, #tpu.memory_space<vmem>>, vector<1x8x128xf32>,
    %c0_21 = arith.constant 0 : index
    %c0_22 = arith.constant 0 : index
    %c0_23 = arith.constant 0 : index
    %41 = vector.load %arg6[%c0_21, %c0_22, %c0_23] : memref<1x8x128xf32, #tpu.memory_space<vmem>>, vector<1x8x128xf32>
    %42 = vector.shape_cast %15 : vector<16x128xf32> to vector<2x8x128xf32>
    %cst_24 = arith.constant dense<0.000000e+00> : vector<8x128xf32>
    %43 = vector.multi_reduction <add>, %42, %cst_24 [0] : vector<2x8x128xf32> to vector<8x128xf32>
    %44 = vector.shape_cast %43 : vector<8x128xf32> to vector<1x8x128xf32>
    %45 = arith.addf %41, %44 : vector<1x8x128xf32>
    %c0_25 = arith.constant 0 : index
    %c0_26 = arith.constant 0 : index
    %c0_27 = arith.constant 0 : index
    %46 = vector.load %arg6[%c0_25, %c0_26, %c0_27] : memref<1x8x128xf32, #tpu.memory_space<vmem>>, vector<1x8x128xf32>
    tpu.vector_store %arg6[%c0_25, %c0_26, %c0_27], %45 {strides = array<i32>} : memref<1x8x128xf32, #tpu.memory_space<vmem>>, vector<1x8x128xf32>,
    return
  }
  func.func @transform_0(%arg0: i32, %arg1: i32) -> (i32, i32) {
    %c1_i32 = arith.constant 1 : i32
    %0 = arith.muli %arg0, %c1_i32 : i32
    %1 = arith.addi %0, %arg1 : i32
    %c0_i32 = arith.constant 0 : i32
    %2 = arith.minsi %1, %c0_i32 : i32
    %c0_i32_0 = arith.constant 0 : i32
    %c0_i32_1 = arith.constant 0 : i32
    return %2, %c0_i32_0 : i32, i32
  }
  func.func @transform_1(%arg0: i32, %arg1: i32) -> (i32, i32) {
    %c1_i32 = arith.constant 1 : i32
    %0 = arith.muli %arg0, %c1_i32 : i32
    %1 = arith.addi %0, %arg1 : i32
    %c0_i32 = arith.constant 0 : i32
    %2 = arith.minsi %1, %c0_i32 : i32
    %c0_i32_0 = arith.constant 0 : i32
    %c0_i32_1 = arith.constant 0 : i32
    return %2, %c0_i32_0 : i32, i32
  }
  func.func @transform_2(%arg0: i32, %arg1: i32) -> (i32, i32) {
    %c1_i32 = arith.constant 1 : i32
    %0 = arith.muli %arg0, %c1_i32 : i32
    %1 = arith.addi %0, %arg1 : i32
    %c0_i32 = arith.constant 0 : i32
    %2 = arith.minsi %1, %c0_i32 : i32
    %c0_i32_0 = arith.constant 0 : i32
    %c0_i32_1 = arith.constant 0 : i32
    return %2, %c0_i32_0 : i32, i32
  }
  func.func @transform_3(%arg0: i32, %arg1: i32) -> (i32, i32, i32) {
    %c0_i32 = arith.constant 0 : i32
    %c0_i32_0 = arith.constant 0 : i32
    %c0_i32_1 = arith.constant 0 : i32
    return %arg0, %c0_i32, %c0_i32_0 : i32, i32, i32
  }
  func.func @transform_4(%arg0: i32, %arg1: i32) -> (i32, i32, i32) {
    %c0_i32 = arith.constant 0 : i32
    %c0_i32_0 = arith.constant 0 : i32
    %c0_i32_1 = arith.constant 0 : i32
    return %arg0, %c0_i32, %c0_i32_0 : i32, i32, i32
  }
}

</mosaic_0001>

<llo_original>
// kernel: tpu_custom_call.1
$region0: #{tpu_custom_call.1}
  #allocation0 [shape = 'u32[]', space=smem, size = 0x4, offset = 0x4, fixed_abs, tag = 'smem constant byte address 0x4 - core index']
  #allocation1 [shape = 'u32[144,128]{1,0:T(1,128)}', space=vmem, size = 0x12000, scoped, tag = 'internal scratch']
  %s0 = inlined_call_operand.hbm [shape: f32[16,128], index: 0, kind: input, shape index: {}]
  %s1 = inlined_call_operand.hbm [shape: f32[16,128], index: 1, kind: input, shape index: {}]
  %s2 = inlined_call_operand.hbm [shape: f32[16,128], index: 2, kind: input, shape index: {}]
  %s3 = inlined_call_operand.hbm [shape: f32[1,8,128], index: 3, kind: output, shape index: {0}]
  %s4 = inlined_call_operand.hbm [shape: f32[1,8,128], index: 4, kind: output, shape index: {1}]
  %5 = xla_tuple %s3, %s4
  %s6 = sld [smem:[#allocation0]]
  $region46: #{tpu_custom_call.1} parent=0
    _
  %s8 = ssub.s32 1, %s6
  %s9 = scalar_select 0, %s8, %s6
  $region1: #{tpu_custom_call.1} parent=0
    #allocation2 [shape = 'u8[8192]{0}', space=vmem, size = 0x2000, scoped, tag = 'input window, operand 0, single buffered']
    #allocation3 [shape = 's32[1]{0}', space=sflag, size = 0x4, scoped, tag = 'scoped memory for tpu_custom_call.1']
    #allocation4 [shape = 's32[1]{0}', space=sflag, size = 0x4, scoped, tag = 'scoped memory for tpu_custom_call.1']
    #allocation5 [shape = 'u8[8192]{0}', space=vmem, size = 0x2000, scoped, tag = 'input window, operand 1, single buffered']
    #allocation6 [shape = 's32[1]{0}', space=sflag, size = 0x4, scoped, tag = 'scoped memory for tpu_custom_call.1']
    #allocation7 [shape = 'u8[8192]{0}', space=vmem, size = 0x2000, scoped, tag = 'input window, operand 2, single buffered']
    #allocation8 [shape = 'u8[4096]{0}', space=vmem, size = 0x1000, scoped, tag = 'output window, operand 0, single buffered']
    #allocation9 [shape = 'u8[4096]{0}', space=vmem, size = 0x1000, scoped, tag = 'output window, operand 1, single buffered']
    #allocation10 [shape = 's32[1]{0}', space=sflag, size = 0x4, scoped, tag = 'scoped memory for tpu_custom_call.1']
    %10 = vsyncpa [#allocation3], 0
    %11 = vsyncpa [#allocation6], 0
    %12 = vsyncpa [#allocation4], 0
    %13 = vsyncpa [#allocation10], 0
    // Predicated region
    $region2: #{tpu_custom_call.1} parent=1 // pred_check
      _
    $region3: #{tpu_custom_call.1} parent=1 // pred_check_branch
      %15 = sbr.rel (0) target = $region5
    $region4: #{tpu_custom_call.1} parent=1 // pred_region
      %s16 = sadd.s32 0, 0
      %p17 = scmp.lt.s32.totalorder %s16, 0
      %s18 = scalar_select %p17, %s16, 0
      %s19 = smul.u32 2, %s18
      %s21 = ssub.s32 256, 256
      %22 = vsyncadd [#allocation3], %s21
      %s23 = smul.addr %s19, 128
      %s24 = scalar_lea.hbm %s0, %s23
      %s25 = sshll.u32 [#allocation2], 4
      %s26 = int_to_ptr.vmem [resolvable:$true] %s25
      %31 = dma.hbm_to_vmem [thread:$0]  %s24, 256, %s26, [#allocation3], 128, 128, 8
    $region5: #{tpu_custom_call.1} parent=1 // pred_fallthru
      _
    // Predicated region
    $region6: #{tpu_custom_call.1} parent=1 // pred_check
      _
    $region7: #{tpu_custom_call.1} parent=1 // pred_check_branch
      %33 = sbr.rel (0) target = $region9
    $region8: #{tpu_custom_call.1} parent=1 // pred_region
      %s34 = sadd.s32 0, 0
      %p35 = scmp.lt.s32.totalorder %s34, 0
      %s36 = scalar_select %p35, %s34, 0
      %s37 = smul.u32 2, %s36
      %s39 = ssub.s32 256, 256
      %40 = vsyncadd [#allocation6], %s39
      %s41 = smul.addr %s37, 128
      %s42 = scalar_lea.hbm %s1, %s41
      %s43 = sshll.u32 [#allocation5], 4
      %s44 = int_to_ptr.vmem [resolvable:$true] %s43
      %49 = dma.hbm_to_vmem [thread:$0]  %s42, 256, %s44, [#allocation6], 128, 128, 8
    $region9: #{tpu_custom_call.1} parent=1 // pred_fallthru
      _
    // Predicated region
    $region10: #{tpu_custom_call.1} parent=1 // pred_check
      _
    $region11: #{tpu_custom_call.1} parent=1 // pred_check_branch
      %51 = sbr.rel (0) target = $region13
    $region12: #{tpu_custom_call.1} parent=1 // pred_region
      %s52 = sadd.s32 0, 0
      %p53 = scmp.lt.s32.totalorder %s52, 0
      %s54 = scalar_select %p53, %s52, 0
      %s55 = smul.u32 2, %s54
      %s57 = ssub.s32 256, 256
      %58 = vsyncadd [#allocation6], %s57
      %s59 = smul.addr %s55, 128
      %s60 = scalar_lea.hbm %s2, %s59
      %s61 = sshll.u32 [#allocation7], 4
      %s62 = int_to_ptr.vmem [resolvable:$true] %s61
      %67 = dma.hbm_to_vmem [thread:$0]  %s60, 256, %s62, [#allocation6], 128, 128, 8
    $region13: #{tpu_custom_call.1} parent=1 // pred_fallthru
      _
    // Predicated region
    $region14: #{tpu_custom_call.1} parent=1 // pred_check
      _
    $region15: #{tpu_custom_call.1} parent=1 // pred_check_branch
      %69 = sbr.rel (0) target = $region17
    $region16: #{tpu_custom_call.1} parent=1 // pred_region
      %70 = dma.done [#allocation3], 256
    $region17: #{tpu_custom_call.1} parent=1 // pred_fallthru
      _
    // Predicated region
    $region18: #{tpu_custom_call.1} parent=1 // pred_check
      _
    $region19: #{tpu_custom_call.1} parent=1 // pred_check_branch
      %72 = sbr.rel (0) target = $region21
    $region20: #{tpu_custom_call.1} parent=1 // pred_region
      %73 = dma.done [#allocation6], 256
    $region21: #{tpu_custom_call.1} parent=1 // pred_fallthru
      _
    // Predicated region
    $region22: #{tpu_custom_call.1} parent=1 // pred_check
      _
    $region23: #{tpu_custom_call.1} parent=1 // pred_check_branch
      %75 = sbr.rel (0) target = $region25
    $region24: #{tpu_custom_call.1} parent=1 // pred_region
      %76 = dma.done [#allocation6], 256
    $region25: #{tpu_custom_call.1} parent=1 // pred_fallthru
      _
    %s77 = sadd.s32 0, 0
    %p78 = scmp.lt.s32.totalorder %s77, 0
    %s79 = scalar_select %p78, %s77, 0
    %s80 = smul.u32 2, %s79
    %s81 = sadd.s32 0, 0
    %p82 = scmp.lt.s32.totalorder %s81, 0
    %s83 = scalar_select %p82, %s81, 0
    %s84 = smul.u32 2, %s83
    %s85 = sadd.s32 0, 0
    %p86 = scmp.lt.s32.totalorder %s85, 0
    %s87 = scalar_select %p86, %s85, 0
    %s88 = smul.u32 2, %s87
    %p89 = scmp.eq.s32.totalorder 0, 0
    // Predicated region
    $region26: #{tpu_custom_call.1} parent=1 // pred_check
      %p90 = pneg %p89
    $region27: #{tpu_custom_call.1} parent=1 // pred_check_branch
      %92 = sbr.rel (%p90) target = $region29
    $region28: #{tpu_custom_call.1} parent=1 // pred_region
      %93 = vst [vmem:[#allocation8] sm:$0xff] 0.0
      %94 = vst [vmem:[#allocation9] sm:$0xff] 0.0
    $region29: #{tpu_custom_call.1} parent=1 // pred_fallthru
      _
    %s95 = sadd.s32 0, 0
    %s96 = smul.u32 %s95, 16
    %v97 = vlaneseq
    %v98 = vshrl.u32 %v97, 7
    %v99 = vadd.s32 %v98, 8
    %s100 = ssub.s32 16, %s96
    %v101 = vstv %s100
    %vm102 = vcmp.lt.s32.totalorder %v98, %v101
    %vm103 = vcmp.lt.s32.totalorder %v99, %v101
    %v104 = vld [vmem:[#allocation2] sm:$0xff]
    %v105 = vld [vmem:[#allocation2 + $0x8] sm:$0xff]
    %v106 = vsel %vm102, %v104, 0.5
    %v107 = vsel %vm103, %v105, 0.5
    %v108 = vld [vmem:[#allocation5] sm:$0xff]
    %v109 = vld [vmem:[#allocation5 + $0x8] sm:$0xff]
    %v110 = vsel %vm102, %v108, 0.0
    %v111 = vsel %vm103, %v109, 0.0
    %v112 = vlog2.pop %v106
    %v113 = vmul.f32 %v112, 0.6931472
    %v114 = vlog2.pop %v107
    %v115 = vmul.f32 %v114, 0.6931472
    %v116 = vmax.f32 %v113, -100.0
    %v117 = vmax.f32 %v115, -100.0
    %v118 = vsub.f32 1.0, %v106
    %v119 = vsub.f32 1.0, %v107
    %v120 = vlog2.pop %v118
    %v121 = vmul.f32 %v120, 0.6931472
    %v122 = vlog2.pop %v119
    %v123 = vmul.f32 %v122, 0.6931472
    %v124 = vmax.f32 %v121, -100.0
    %v125 = vmax.f32 %v123, -100.0
    %v126 = vmul.f32 %v110, %v116
    %v127 = vmul.f32 %v111, %v117
    %v128 = vsub.f32 1.0, %v110
    %v129 = vsub.f32 1.0, %v111
    %v130 = vmul.f32 %v128, %v124
    %v131 = vmul.f32 %v129, %v125
    %v132 = vadd.f32 %v126, %v130
    %v133 = vadd.f32 %v127, %v131
    %v134 = vsub.f32 0.0, %v132
    %v135 = vsub.f32 0.0, %v133
    %v136 = vld [vmem:[#allocation7] sm:$0xff]
    %v137 = vld [vmem:[#allocation7 + $0x8] sm:$0xff]
    %v138 = vsel %vm102, %v136, 0.0
    %v139 = vsel %vm103, %v137, 0.0
    %v140 = vmul.f32 %v134, %v138
    %v141 = vmul.f32 %v135, %v139
    %v142 = vld [vmem:[#allocation8] sm:$0xff]
    %v143 = vadd.f32 %v140, %v141
    %v144 = vadd.f32 %v142, %v143
    %145 = vst [vmem:[#allocation8] sm:$0xff] %v144
    %v146 = vld [vmem:[#allocation9] sm:$0xff]
    %v147 = vadd.f32 %v110, %v111
    %v148 = vadd.f32 %v146, %v147
    %149 = vst [vmem:[#allocation9] sm:$0xff] %v148
    // Predicated region
    $region30: #{tpu_custom_call.1} parent=1 // pred_check
      _
    $region31: #{tpu_custom_call.1} parent=1 // pred_check_branch
      %151 = sbr.rel (0) target = $region33
    $region32: #{tpu_custom_call.1} parent=1 // pred_region
      %s153 = ssub.s32 128, 128
      %154 = vsyncadd [#allocation4], %s153
      %s156 = sshll.u32 [#allocation8], 4
      %s157 = int_to_ptr.vmem [resolvable:$true] %s156
      %159 = dma.vmem_to_hbm [thread:$0]  %s157, 128, %s3, [#allocation4]
    $region33: #{tpu_custom_call.1} parent=1 // pred_fallthru
      _
    // Predicated region
    $region34: #{tpu_custom_call.1} parent=1 // pred_check
      _
    $region35: #{tpu_custom_call.1} parent=1 // pred_check_branch
      %161 = sbr.rel (0) target = $region37
    $region36: #{tpu_custom_call.1} parent=1 // pred_region
      %s163 = ssub.s32 128, 128
      %164 = vsyncadd [#allocation10], %s163
      %s166 = sshll.u32 [#allocation9], 4
      %s167 = int_to_ptr.vmem [resolvable:$true] %s166
      %169 = dma.vmem_to_hbm [thread:$0]  %s167, 128, %s4, [#allocation10]
    $region37: #{tpu_custom_call.1} parent=1 // pred_fallthru
      _
    // Predicated region
    $region38: #{tpu_custom_call.1} parent=1 // pred_check
      _
    $region39: #{tpu_custom_call.1} parent=1 // pred_check_branch
      %171 = sbr.rel (0) target = $region41
    $region40: #{tpu_custom_call.1} parent=1 // pred_region
      %172 = dma.done [#allocation4], 128
    $region41: #{tpu_custom_call.1} parent=1 // pred_fallthru
      _
    // Predicated region
    $region42: #{tpu_custom_call.1} parent=1 // pred_check
      _
    $region43: #{tpu_custom_call.1} parent=1 // pred_check_branch
      %174 = sbr.rel (0) target = $region45
    $region44: #{tpu_custom_call.1} parent=1 // pred_region
      %175 = dma.done [#allocation10], 128
    $region45: #{tpu_custom_call.1} parent=1 // pred_fallthru
      _
    %176 = vsyncpa [#allocation3], 1
    %177 = vsyncpa [#allocation6], 1
    %178 = vsyncpa [#allocation4], 1
    %179 = vsyncpa [#allocation10], 1

</llo_original>
